<compile_context>
chip_gen: v7x
topology: tpu7x:2x2x1
jax: 0.10.0
libtpu: 0.0.40
codegen_flags: <defaults>
</compile_context>

<pallas_src>
import jax
import jax.numpy as jnp
from jax import lax
from jax.experimental import pallas as pl
from jax.experimental.pallas import tpu as pltpu


def attention_kernel(x_ref, w1_ref, b1_ref, w2t_ref, b2t_ref, o_ref):
    x = x_ref[...]                                            # (TB, K)

    # ---- Linear 1 + ReLU on the MXU (f32 accumulation) ----
    h = jnp.dot(x, w1_ref[...], preferred_element_type=jnp.float32) + b1_ref[...]
    h = jnp.maximum(h, 0.0)                                   # (TB, H)

    # ---- Linear 2 as a single transposed matmul: logits[j, b] = sum_h W2[h,j]*h[b,h] ----
    # Result is (num, TB): batch on the lane axis -> lane-dense output stores.
    logits = lax.dot_general(
        w2t_ref[...], h,                                      # (num, H) x (TB, H)
        dimension_numbers=(((1,), (1,)), ((), ())),
        preferred_element_type=jnp.float32,
    ) + b2t_ref[...]                                          # + (num, 1) bias

    # ---- Numerically stable softmax over the `num` (sublane) axis ----
    # == torch Softmax(dim=1) after the wrapper transposes back to (B, num).
    m = jnp.max(logits, axis=0, keepdims=True)                # (1, TB)
    e = jnp.exp(logits - m)
    denom = jnp.sum(e, axis=0, keepdims=True)                 # (1, TB)
    o_ref[...] = e * pl.reciprocal(denom, approx=False)       # (num, TB)


def _round_up(v, m):
    return (v + m - 1) // m * m


def _pick_tile(batch, tile_b):
    """Batch tile: multiple of 128 (lane-dense out block) unless it spans B."""
    tb = max(128, (min(tile_b, batch) // 128) * 128)
    if tb >= batch:
        tb = batch
    # Guarantee >= 2 grid steps when the batch is large enough so the
    # "parallel" axis can shard across v7x's two TensorCores.
    if tb == batch and batch >= 256:
        tb = min(_round_up(pl.cdiv(batch, 2), 128), batch)
    return tb


def _vmem_estimate(tb, K, H, num):
    """Lane/sublane-padded, double-buffered VMEM footprint of all blocks."""
    def padded(rows, cols):
        return _round_up(rows, 8) * _round_up(cols, 128) * 4  # f32
    x_buf = 2 * padded(tb, K)                                 # streamed input
    o_buf = 2 * padded(num, tb)                               # streamed output
    w_buf = 2 * (padded(K, H) + padded(1, H) + padded(num, H) + padded(num, 1))
    return x_buf + o_buf + w_buf


def attention_forward(x, w1, b1, w2, b2, *, tile_b=8192):
    """softmax(relu(x @ w1 + b1) @ w2 + b2, axis=1) — matches Attention.forward.

    tile_b defaults large (8192) to amortize per-grid-step overhead; the
    __main__ test below uses a small tile only to exercise the multi-step
    pipelined path at tiny shapes.
    """
    B, K = x.shape
    H = w1.shape[1]
    num = w2.shape[1]

    tb = _pick_tile(B, tile_b)
    grid = (pl.cdiv(B, tb),)
    # Note: if B % tb != 0 the last step computes on padded x rows; softmax is
    # column-local in the transposed (num, tb) layout, so valid columns are
    # unaffected and the padded columns are dropped on writeback.

    # Transposed weights/bias so Linear-2 emits (num, tb) directly.
    w2t = jnp.transpose(w2)                                   # (num, H)
    b2t = jnp.transpose(b2)                                   # (num, 1)

    # VMEM budget sized just above the computed need (works on v7x's 64 MiB
    # physical / 32 MiB scoped default, and lets v5e/v6e use bigger tiles).
    need = _vmem_estimate(tb, K, H, num)
    vmem_limit = int(min(64 * 1024 * 1024, max(16 * 1024 * 1024, 2 * need)))

    cost = pl.CostEstimate(
        flops=2 * B * (K * H + H * num),
        transcendentals=B * num,
        bytes_accessed=4 * (B * K + K * H + H + H * num + num + B * num),
    )

    out_t = pl.pallas_call(
        attention_kernel,
        out_shape=jax.ShapeDtypeStruct((num, B), jnp.float32),
        grid=grid,
        in_specs=[
            pl.BlockSpec((tb, K), lambda i: (i, 0)),          # x: streamed per tile
            pl.BlockSpec((K, H), lambda i: (0, 0)),           # W1: resident in VMEM
            pl.BlockSpec((1, H), lambda i: (0, 0)),           # b1: resident
            pl.BlockSpec((num, H), lambda i: (0, 0)),         # W2^T: resident
            pl.BlockSpec((num, 1), lambda i: (0, 0)),         # b2^T: resident
        ],
        out_specs=pl.BlockSpec((num, tb), lambda i: (0, i)),  # lane-dense output
        compiler_params=pltpu.CompilerParams(
            dimension_semantics=("parallel",),                # shard batch tiles across TCs
            vmem_limit_bytes=vmem_limit,
        ),
        cost_estimate=cost,
    )(x, w1, b1, w2t, b2t)

    return jnp.transpose(out_t)                               # (B, num)


def init_params(key, feature, num, hidden_size):
    """Deterministic init mirroring nn.Linear's uniform(-1/sqrt(fan_in), 1/sqrt(fan_in))."""
    in1 = feature * num
    k1, k2, k3, k4 = jax.random.split(key, 4)
    lim1 = 1.0 / jnp.sqrt(in1)
    lim2 = 1.0 / jnp.sqrt(hidden_size)
    w1 = jax.random.uniform(k1, (in1, hidden_size), jnp.float32, -lim1, lim1)
    b1 = jax.random.uniform(k2, (1, hidden_size), jnp.float32, -lim1, lim1)
    w2 = jax.random.uniform(k3, (hidden_size, num), jnp.float32, -lim2, lim2)
    b2 = jax.random.uniform(k4, (1, num), jnp.float32, -lim2, lim2)
    return w1, b1, w2, b2


if __name__ == "__main__":
    # Small shapes consistent with the module: feature=8, num=4, hidden_size=32.
    # batch=256 with tile_b=128 gives a 2-step grid (exercises the pipelined,
    # lane-dense output path); production callers should keep the large default
    # tile_b.
    feature, num, hidden_size = 8, 4, 32
    batch, tile_b = 256, 128

    key = jax.random.PRNGKey(0)
    k_x, k_x2, k_p = jax.random.split(key, 3)
    x = jax.random.normal(k_x, (batch, feature * num), jnp.float32)
    w1, b1, w2, b2 = init_params(k_p, feature, num, hidden_size)

    out = attention_forward(x, w1, b1, w2, b2, tile_b=tile_b)
    out = jax.block_until_ready(out)

    # Pure-JAX reference check.
    ref = jax.nn.softmax(jnp.maximum(x @ w1 + b1, 0.0) @ w2 + b2, axis=1)
    assert out.shape == (batch, num)
    assert jnp.allclose(out, ref, atol=1e-5, rtol=1e-5), float(jnp.max(jnp.abs(out - ref)))
    assert jnp.allclose(jnp.sum(out, axis=1), 1.0, atol=1e-5)

    # Non-divisible batch: last grid step is a partial block; padded columns in
    # the transposed layout never touch valid ones and are dropped on writeback.
    x2 = jax.random.normal(k_x2, (200, feature * num), jnp.float32)
    out2 = jax.block_until_ready(attention_forward(x2, w1, b1, w2, b2, tile_b=tile_b))
    ref2 = jax.nn.softmax(jnp.maximum(x2 @ w1 + b1, 0.0) @ w2 + b2, axis=1)
    assert jnp.allclose(out2, ref2, atol=1e-5, rtol=1e-5)

    print("KERNEL_OK")
</pallas_src>

<mosaic_0001>
module attributes {stable_mosaic.version = 11 : i64} {
  func.func @attention_kernel(%arg0: i32, %arg1: memref<128x32xf32, #tpu.memory_space<vmem>>, %arg2: memref<32x32xf32, #tpu.memory_space<vmem>>, %arg3: memref<1x32xf32, #tpu.memory_space<vmem>>, %arg4: memref<4x32xf32, #tpu.memory_space<vmem>>, %arg5: memref<4x1xf32, #tpu.memory_space<vmem>>, %arg6: memref<4x128xf32, #tpu.memory_space<vmem>>) attributes {dimension_semantics = [#tpu.dimension_semantics<parallel>], iteration_bounds = array<i64: 2>, scalar_prefetch = 0 : i64, scratch_operands = 0 : i64, tpu.core_type = #tpu.core_type<tc>, window_params = [{transform_indices = @transform_0, window_bounds = array<i64: 128, 32>}, {pipeline_mode = #tpu.pipeline_mode<synchronous>, transform_indices = @transform_1, window_bounds = array<i64: 32, 32>}, {pipeline_mode = #tpu.pipeline_mode<synchronous>, transform_indices = @transform_2, window_bounds = array<i64: 1, 32>}, {pipeline_mode = #tpu.pipeline_mode<synchronous>, transform_indices = @transform_3, window_bounds = array<i64: 4, 32>}, {pipeline_mode = #tpu.pipeline_mode<synchronous>, transform_indices = @transform_4, window_bounds = array<i64: 4, 1>}, {transform_indices = @transform_5, window_bounds = array<i64: 4, 128>}]} {
    %c0 = arith.constant 0 : index
    %c0_0 = arith.constant 0 : index
    %0 = vector.load %arg1[%c0, %c0_0] : memref<128x32xf32, #tpu.memory_space<vmem>>, vector<128x32xf32>
    %c0_1 = arith.constant 0 : index
    %c0_2 = arith.constant 0 : index
    %1 = vector.load %arg2[%c0_1, %c0_2] : memref<32x32xf32, #tpu.memory_space<vmem>>, vector<32x32xf32>
    %cst = arith.constant dense<0.000000e+00> : vector<128x32xf32>
    %2 = tpu.matmul %0, %1, %cst {dimension_numbers = #tpu.dot_dimension_numbers<[1], [0], [0], [1], [0, 0, 1, 1], [], []>} : vector<128x32xf32>, vector<32x32xf32>, vector<128x32xf32> -> vector<128x32xf32>
    %c0_3 = arith.constant 0 : index
    %c0_4 = arith.constant 0 : index
    %3 = vector.load %arg3[%c0_3, %c0_4] : memref<1x32xf32, #tpu.memory_space<vmem>>, vector<1x32xf32>
    %4 = vector.broadcast %3 : vector<1x32xf32> to vector<128x32xf32>
    %5 = arith.addf %2, %4 : vector<128x32xf32>
    %cst_5 = arith.constant 0.000000e+00 : f32
    %6 = vector.broadcast %cst_5 : f32 to vector<128x32xf32>
    %7 = arith.maximumf %5, %6 : vector<128x32xf32>
    %c0_6 = arith.constant 0 : index
    %c0_7 = arith.constant 0 : index
    %8 = vector.load %arg4[%c0_6, %c0_7] : memref<4x32xf32, #tpu.memory_space<vmem>>, vector<4x32xf32>
    %cst_8 = arith.constant dense<0.000000e+00> : vector<4x128xf32>
    %9 = tpu.matmul %8, %7, %cst_8 {dimension_numbers = #tpu.dot_dimension_numbers<[1], [1], [0], [0], [0, 0, 1, 0], [], []>} : vector<4x32xf32>, vector<128x32xf32>, vector<4x128xf32> -> vector<4x128xf32>
    %c0_9 = arith.constant 0 : index
    %c0_10 = arith.constant 0 : index
    %10 = vector.load %arg5[%c0_9, %c0_10] : memref<4x1xf32, #tpu.memory_space<vmem>>, vector<4x1xf32>
    %11 = vector.broadcast %10 : vector<4x1xf32> to vector<4x128xf32>
    %12 = arith.addf %9, %11 : vector<4x128xf32>
    %cst_11 = arith.constant dense<0xFF800000> : vector<128xf32>
    %13 = vector.multi_reduction <maximumf>, %12, %cst_11 [0] : vector<4x128xf32> to vector<128xf32>
    %14 = vector.shape_cast %13 : vector<128xf32> to vector<1x128xf32>
    %15 = vector.broadcast %14 : vector<1x128xf32> to vector<4x128xf32>
    %16 = arith.subf %12, %15 : vector<4x128xf32>
    %17 = math.exp %16 : vector<4x128xf32>
    %cst_12 = arith.constant dense<0.000000e+00> : vector<128xf32>
    %18 = vector.multi_reduction <add>, %17, %cst_12 [0] : vector<4x128xf32> to vector<128xf32>
    %19 = vector.shape_cast %18 : vector<128xf32> to vector<1x128xf32>
    %20 = tpu.reciprocal %19 : vector<1x128xf32> -> vector<1x128xf32>
    %21 = vector.broadcast %20 : vector<1x128xf32> to vector<4x128xf32>
    %22 = arith.mulf %17, %21 : vector<4x128xf32>
    %c0_13 = arith.constant 0 : index
    %c0_14 = arith.constant 0 : index
    %23 = vector.load %arg6[%c0_13, %c0_14] : memref<4x128xf32, #tpu.memory_space<vmem>>, vector<4x128xf32>
    tpu.vector_store %arg6[%c0_13, %c0_14], %22 {strides = array<i32>} : memref<4x128xf32, #tpu.memory_space<vmem>>, vector<4x128xf32>,
    return
  }
  func.func @transform_0(%arg0: i32) -> (i32, i32) {
    %c0_i32 = arith.constant 0 : i32
    %c0_i32_0 = arith.constant 0 : i32
    return %arg0, %c0_i32 : i32, i32
  }
  func.func @transform_1(%arg0: i32) -> (i32, i32) {
    %c0_i32 = arith.constant 0 : i32
    %c0_i32_0 = arith.constant 0 : i32
    %c0_i32_1 = arith.constant 0 : i32
    return %c0_i32, %c0_i32_0 : i32, i32
  }
  func.func @transform_2(%arg0: i32) -> (i32, i32) {
    %c0_i32 = arith.constant 0 : i32
    %c0_i32_0 = arith.constant 0 : i32
    %c0_i32_1 = arith.constant 0 : i32
    return %c0_i32, %c0_i32_0 : i32, i32
  }
  func.func @transform_3(%arg0: i32) -> (i32, i32) {
    %c0_i32 = arith.constant 0 : i32
    %c0_i32_0 = arith.constant 0 : i32
    %c0_i32_1 = arith.constant 0 : i32
    return %c0_i32, %c0_i32_0 : i32, i32
  }
  func.func @transform_4(%arg0: i32) -> (i32, i32) {
    %c0_i32 = arith.constant 0 : i32
    %c0_i32_0 = arith.constant 0 : i32
    %c0_i32_1 = arith.constant 0 : i32
    return %c0_i32, %c0_i32_0 : i32, i32
  }
  func.func @transform_5(%arg0: i32) -> (i32, i32) {
    %c0_i32 = arith.constant 0 : i32
    %c0_i32_0 = arith.constant 0 : i32
    return %c0_i32, %arg0 : i32, i32
  }
}

</mosaic_0001>

<llo_original>
// kernel: tpu_custom_call.1
$region0: #{tpu_custom_call.1}
  #allocation0 [shape = 'u32[]', space=smem, size = 0x4, offset = 0x4, fixed_abs, tag = 'smem constant byte address 0x4 - core index']
  #allocation1 [shape = 'u32[144,128]{1,0:T(1,128)}', space=vmem, size = 0x12000, scoped, tag = 'internal scratch']
  %s0 = inlined_call_operand.vmem [shape: f32[256,32], index: 0, kind: input, shape index: {}]
  %s1 = inlined_call_operand.vmem [shape: f32[32,32], index: 1, kind: input, shape index: {}]
  %s2 = inlined_call_operand.vmem [shape: f32[1,32], index: 2, kind: input, shape index: {}]
  %s3 = inlined_call_operand.vmem [shape: f32[4,32], index: 3, kind: input, shape index: {}]
  %s4 = inlined_call_operand.vmem [shape: f32[4,1], index: 4, kind: input, shape index: {}]
  %s5 = inlined_call_operand.hbm [shape: f32[4,256], index: 5, kind: output, shape index: {}]
  %s6 = sld [smem:[#allocation0]]
  $region53: #{tpu_custom_call.1} parent=0
    _
  %s8 = ssub.s32 1, %s6
  %s9 = scalar_select 0, %s8, %s6
  $region1: #{tpu_custom_call.1} parent=0
    #allocation2 [shape = 'u8[4096]{0}', space=vmem, size = 0x1000, scoped, tag = 'output window, operand 0']
    #allocation3 [shape = 's32[2]{0}', space=sflag, size = 0x8, scoped, tag = 'scoped memory for tpu_custom_call.1']
    %10 = vsyncpa [#allocation3], 0
    %s11 = scalar_lea.sflag [#allocation3], 1
    %12 = vsyncpa %s11, 0
    loop: start=0, step=1, limit=4
    $region2: #{tpu_custom_call.1} parent=1 // loop_pre_header
      _
    $region3: #{tpu_custom_call.1} parent=1 // loop_header
      %s14 = sphi 0, %s18
      %p15 = scmp.ge.s32.totalorder %s14, 4
      %s24 = sphi 0, %s26
      %s27 = sphi 0, %s24
      %s28 = sphi 0, %s27
      %s44 = sphi 0, %s28
      %s48 = sphi 0, %s48
      %s50 = sphi 0, %s48
      %s51 = sphi 0, %s50
      %s65 = sphi 0, %s51
      %s69 = sphi 0, %s69
      %s71 = sphi 0, %s69
      %s72 = sphi 0, %s71
      %s86 = sphi 0, %s72
      %s90 = sphi 0, %s90
      %s92 = sphi 0, %s90
      %s93 = sphi 0, %s92
      %s107 = sphi 0, %s93
      %s111 = sphi 0, %s111
      %s113 = sphi 0, %s111
      %s114 = sphi 0, %s113
      %s128 = sphi 0, %s114
      %s134 = sphi 0, %s136
      %s137 = sphi 0, %s134
      %s138 = sphi 0, %s137
      %s154 = sphi 0, %s138
    $region4: #{tpu_custom_call.1} parent=1 // loop_header_branch
      %17 = sbr.rel (%p15) target = $region8
    $region5: #{tpu_custom_call.1} parent=1 // loop_body
      %s19 = ssub.s32 %s14, 1
      %s20 = ssub.s32 %s14, 2
      %s21 = sadd.s32 %s14, 1
      %s22 = ssub.s32 %s14, %s21
      %p23 = scmp.eq.s32.totalorder %s22, 0
      %s25 = sadd.s32 %s24, 1
      %s26 = scalar_select %p23, %s24, %s25
      %p29 = pneg %p23
      %p30 = scmp.eq.s32.totalorder %s14, 1
      %p31 = por %p29, %p30
      %p32 = scmp.ne.s32.totalorder %s24, %s27
      %p33 = scmp.eq.s32.totalorder %s14, 0
      %p34 = por %p32, %p33
      %p35 = scmp.ne.s32.totalorder %s24, %s27
      %p36 = scmp.eq.s32.totalorder %s19, 1
      %p37 = por %p35, %p36
      %p38 = scmp.ne.s32.totalorder %s27, %s28
      %p39 = scmp.eq.s32.totalorder %s19, 0
      %p40 = por %p38, %p39
      %p41 = scmp.ne.s32.totalorder %s27, %s28
      %p42 = scmp.eq.s32.totalorder %s20, 1
      %p43 = por %p41, %p42
      %p45 = scmp.ne.s32.totalorder %s28, %s44
      %p46 = scmp.eq.s32.totalorder %s20, 0
      %p47 = por %p45, %p46
      %s49 = sadd.s32 %s48, 1
      %p52 = scmp.eq.s32.totalorder %s14, 1
      %p53 = scmp.ne.s32.totalorder %s48, %s50
      %p54 = scmp.eq.s32.totalorder %s14, 0
      %p55 = por %p53, %p54
      %p56 = scmp.ne.s32.totalorder %s48, %s50
      %p57 = scmp.eq.s32.totalorder %s19, 1
      %p58 = por %p56, %p57
      %p59 = scmp.ne.s32.totalorder %s50, %s51
      %p60 = scmp.eq.s32.totalorder %s19, 0
      %p61 = por %p59, %p60
      %p62 = scmp.ne.s32.totalorder %s50, %s51
      %p63 = scmp.eq.s32.totalorder %s20, 1
      %p64 = por %p62, %p63
      %p66 = scmp.ne.s32.totalorder %s51, %s65
      %p67 = scmp.eq.s32.totalorder %s20, 0
      %p68 = por %p66, %p67
      %s70 = sadd.s32 %s69, 1
      %p73 = scmp.eq.s32.totalorder %s14, 1
      %p74 = scmp.ne.s32.totalorder %s69, %s71
      %p75 = scmp.eq.s32.totalorder %s14, 0
      %p76 = por %p74, %p75
      %p77 = scmp.ne.s32.totalorder %s69, %s71
      %p78 = scmp.eq.s32.totalorder %s19, 1
      %p79 = por %p77, %p78
      %p80 = scmp.ne.s32.totalorder %s71, %s72
      %p81 = scmp.eq.s32.totalorder %s19, 0
      %p82 = por %p80, %p81
      %p83 = scmp.ne.s32.totalorder %s71, %s72
      %p84 = scmp.eq.s32.totalorder %s20, 1
      %p85 = por %p83, %p84
      %p87 = scmp.ne.s32.totalorder %s72, %s86
      %p88 = scmp.eq.s32.totalorder %s20, 0
      %p89 = por %p87, %p88
      %s91 = sadd.s32 %s90, 1
      %p94 = scmp.eq.s32.totalorder %s14, 1
      %p95 = scmp.ne.s32.totalorder %s90, %s92
      %p96 = scmp.eq.s32.totalorder %s14, 0
      %p97 = por %p95, %p96
      %p98 = scmp.ne.s32.totalorder %s90, %s92
      %p99 = scmp.eq.s32.totalorder %s19, 1
      %p100 = por %p98, %p99
      %p101 = scmp.ne.s32.totalorder %s92, %s93
      %p102 = scmp.eq.s32.totalorder %s19, 0
      %p103 = por %p101, %p102
      %p104 = scmp.ne.s32.totalorder %s92, %s93
      %p105 = scmp.eq.s32.totalorder %s20, 1
      %p106 = por %p104, %p105
      %p108 = scmp.ne.s32.totalorder %s93, %s107
      %p109 = scmp.eq.s32.totalorder %s20, 0
      %p110 = por %p108, %p109
      %s112 = sadd.s32 %s111, 1
      %p115 = scmp.eq.s32.totalorder %s14, 1
      %p116 = scmp.ne.s32.totalorder %s111, %s113
      %p117 = scmp.eq.s32.totalorder %s14, 0
      %p118 = por %p116, %p117
      %p119 = scmp.ne.s32.totalorder %s111, %s113
      %p120 = scmp.eq.s32.totalorder %s19, 1
      %p121 = por %p119, %p120
      %p122 = scmp.ne.s32.totalorder %s113, %s114
      %p123 = scmp.eq.s32.totalorder %s19, 0
      %p124 = por %p122, %p123
      %p125 = scmp.ne.s32.totalorder %s113, %s114
      %p126 = scmp.eq.s32.totalorder %s20, 1
      %p127 = por %p125, %p126
      %p129 = scmp.ne.s32.totalorder %s114, %s128
      %p130 = scmp.eq.s32.totalorder %s20, 0
      %p131 = por %p129, %p130
      %s132 = ssub.s32 %s14, %s21
      %p133 = scmp.eq.s32.totalorder %s132, 0
      %s135 = sadd.s32 %s134, 1
      %s136 = scalar_select %p133, %s134, %s135
      %p139 = pneg %p133
      %p140 = scmp.eq.s32.totalorder %s14, 1
      %p141 = por %p139, %p140
      %p142 = scmp.ne.s32.totalorder %s134, %s137
      %p143 = scmp.eq.s32.totalorder %s14, 0
      %p144 = por %p142, %p143
      %p145 = scmp.ne.s32.totalorder %s134, %s137
      %p146 = scmp.eq.s32.totalorder %s19, 1
      %p147 = por %p145, %p146
      %p148 = scmp.ne.s32.totalorder %s137, %s138
      %p149 = scmp.eq.s32.totalorder %s19, 0
      %p150 = por %p148, %p149
      %p151 = scmp.ne.s32.totalorder %s137, %s138
      %p152 = scmp.eq.s32.totalorder %s20, 1
      %p153 = por %p151, %p152
      %p155 = scmp.ne.s32.totalorder %s138, %s154
      %p156 = scmp.eq.s32.totalorder %s20, 0
      %p157 = por %p155, %p156
      %p158 = scmp.le.s32.totalorder 1, %s14
      %p159 = scmp.lt.s32.totalorder %s14, 3
      %p160 = pnand %p158, %p159
      %p161 = pneg %p160
      // Predicated region
      $region9: #{tpu_custom_call.1} parent=5 // pred_check
        _
      $region10: #{tpu_custom_call.1} parent=5 // pred_check_branch
        %163 = sbr.rel (%p160) target = $region12
      $region11: #{tpu_custom_call.1} parent=5 // pred_region
        %s164 = ssub.s32 %s14, 1
        // Predicated region
        $region13: #{tpu_custom_call.1} parent=11 // pred_check
          %p165 = pneg %p61
        $region14: #{tpu_custom_call.1} parent=11 // pred_check_branch
          %167 = sbr.rel (%p165) target = $region16
        $region15: #{tpu_custom_call.1} parent=11 // pred_region
          _
        $region16: #{tpu_custom_call.1} parent=11 // pred_fallthru
          _
        // Predicated region
        $region17: #{tpu_custom_call.1} parent=11 // pred_check
          %p168 = pneg %p82
        $region18: #{tpu_custom_call.1} parent=11 // pred_check_branch
          %170 = sbr.rel (%p168) target = $region20
        $region19: #{tpu_custom_call.1} parent=11 // pred_region
          _
        $region20: #{tpu_custom_call.1} parent=11 // pred_fallthru
          _
        // Predicated region
        $region21: #{tpu_custom_call.1} parent=11 // pred_check
          %p171 = pneg %p103
        $region22: #{tpu_custom_call.1} parent=11 // pred_check_branch
          %173 = sbr.rel (%p171) target = $region24
        $region23: #{tpu_custom_call.1} parent=11 // pred_region
          _
        $region24: #{tpu_custom_call.1} parent=11 // pred_fallthru
          _
        // Predicated region
        $region25: #{tpu_custom_call.1} parent=11 // pred_check
          %p174 = pneg %p124
        $region26: #{tpu_custom_call.1} parent=11 // pred_check_branch
          %176 = sbr.rel (%p174) target = $region28
        $region27: #{tpu_custom_call.1} parent=11 // pred_region
          _
        $region28: #{tpu_custom_call.1} parent=11 // pred_fallthru
          _
      $region12: #{tpu_custom_call.1} parent=5 // pred_fallthru
        _
      %p177 = scmp.lt.s32.totalorder %s14, 2
      // Predicated region
      $region29: #{tpu_custom_call.1} parent=5 // pred_check
        %p178 = pneg %p177
      $region30: #{tpu_custom_call.1} parent=5 // pred_check_branch
        %180 = sbr.rel (%p178) target = $region32
      $region31: #{tpu_custom_call.1} parent=5 // pred_region
        // Predicated region
        $region33: #{tpu_custom_call.1} parent=31 // pred_check
          %p181 = pneg %p34
        $region34: #{tpu_custom_call.1} parent=31 // pred_check_branch
          %183 = sbr.rel (%p181) target = $region36
        $region35: #{tpu_custom_call.1} parent=31 // pred_region
          %s184 = smul.u32 16, %s14
          %p185 = scmp.lt.s32.totalorder %s184, 31
          %s186 = scalar_select %p185, %s184, 31
          %s187 = smul.addr %s186, 8
          %s188 = scalar_lea.vmem %s0, %s187
          %s189 = smul.u32 16, %s14
        $region36: #{tpu_custom_call.1} parent=31 // pred_fallthru
          _
      $region32: #{tpu_custom_call.1} parent=5 // pred_fallthru
        _
      %p190 = scmp.le.s32.totalorder 1, %s14
      %p191 = scmp.lt.s32.totalorder %s14, 3
      %p192 = pnand %p190, %p191
      %p193 = pneg %p192
      // Predicated region
      $region37: #{tpu_custom_call.1} parent=5 // pred_check
        _
      $region38: #{tpu_custom_call.1} parent=5 // pred_check_branch
        %195 = sbr.rel (%p192) target = $region40
      $region39: #{tpu_custom_call.1} parent=5 // pred_region
        %s196 = ssub.s32 %s14, 1
        %s197 = smul.u32 16, %s19
        %p198 = scmp.lt.s32.totalorder %s197, 31
        %s199 = scalar_select %p198, %s197, 31
        %s200 = smul.addr %s199, 8
        %s201 = scalar_lea.vmem %s0, %s200
        %p202 = pneg %p40
        %p203 = pneg %p37
        %p204 = pneg %p61
        %p205 = pneg %p58
        %p206 = pneg %p82
        %p207 = pneg %p79
        %p208 = pneg %p103
        %p209 = pneg %p100
        %p210 = pneg %p124
        %p211 = pneg %p121
        %p212 = pneg %p150
        %p213 = pneg %p147
        %s214 = sand.u32 %s137, 1
        %s215 = scalar_lea.sflag [#allocation3], %s214
        %s216 = sand.u32 %s137, 1
        %s217 = smul.addr %s216, 4
        %s218 = scalar_lea.vmem [#allocation2], %s217
        %s219 = smul.u32 16, %s19
        %p220 = scmp.lt.s32.totalorder %s219, 31
        %s221 = scalar_select %p220, %s219, 31
        %s222 = smul.addr %s221, 8
        %s223 = scalar_lea.vmem %s0, %s222
        %s224 = smul.u32 16, %s19
        %v225 = vld [vmem:[%s223] sm:$0xff]
        %v226 = vld [vmem:[%s223 + $0x8] sm:$0xff]
        %v227 = vld [vmem:[%s223 + $0x10] sm:$0xff]
        %v228 = vld [vmem:[%s223 + $0x18] sm:$0xff]
        %v229 = vld [vmem:[%s223 + $0x20] sm:$0xff]
        %v230 = vld [vmem:[%s223 + $0x28] sm:$0xff]
        %v231 = vld [vmem:[%s223 + $0x30] sm:$0xff]
        %v232 = vld [vmem:[%s223 + $0x38] sm:$0xff]
        %v233 = vld [vmem:[%s223 + $0x40] sm:$0xff]
        %v234 = vld [vmem:[%s223 + $0x48] sm:$0xff]
        %v235 = vld [vmem:[%s223 + $0x50] sm:$0xff]
        %v236 = vld [vmem:[%s223 + $0x58] sm:$0xff]
        %v237 = vld [vmem:[%s223 + $0x60] sm:$0xff]
        %v238 = vld [vmem:[%s223 + $0x68] sm:$0xff]
        %v239 = vld [vmem:[%s223 + $0x70] sm:$0xff]
        %v240 = vld [vmem:[%s223 + $0x78] sm:$0xff]
        %v241 = vld [vmem:[%s1] sm:$0xff]
        %v242 = vld [vmem:[%s1 + $0x8] sm:$0xff]
        %v243 = vld [vmem:[%s1 + $0x10] sm:$0xff]
        %v244 = vld [vmem:[%s1 + $0x18] sm:$0xff]
        %v245 = vld [vmem:[%s2] sm:$0x1]
        %v247 = vlaneseq
        %v248 = vshrl.u32 %v247, 7
        %v249 = vsub.s32 0, %v248
        %v250 = vrot.slane %v245, %v249
        %vm252 = vcmask 261120
        %v254 = vsel %vm252, %v225, 0
        %v257 = vsel %vm252, %v226, 0
        %v260 = vsel %vm252, %v227, 0
        %v263 = vsel %vm252, %v228, 0
        %v266 = vsel %vm252, %v229, 0
        %v269 = vsel %vm252, %v230, 0
        %v272 = vsel %vm252, %v231, 0
        %v275 = vsel %vm252, %v232, 0
        %v278 = vsel %vm252, %v233, 0
        %v281 = vsel %vm252, %v234, 0
        %v284 = vsel %vm252, %v235, 0
        %v287 = vsel %vm252, %v236, 0
        %v290 = vsel %vm252, %v237, 0
        %v293 = vsel %vm252, %v238, 0
        %v296 = vsel %vm252, %v239, 0
        %v299 = vsel %vm252, %v240, 0
        %301 = vmatprep.subr.mxu0 0.0
        %302 = vmatpush1.msra.mxu0 %v241
        %303 = vmatprep.subr.mxu0 0.0
        %304 = vmatpush1.msra.mxu0 %v242
        %305 = vmatprep.subr.mxu0 0.0
        %306 = vmatpush1.msra.mxu0 %v243
        %307 = vmatprep.subr.mxu0 0.0
        %308 = vmatpush1.msra.mxu0 %v244
        %309 = vmatprep.subr.mxu0 0.0
        %310 = vmatpush1.msra.mxu0 0.0
        %311 = vmatprep.subr.mxu0 0.0
        %312 = vmatpush1.msra.mxu0 0.0
        %313 = vmatprep.subr.mxu0 0.0
        %314 = vmatpush1.msra.mxu0 0.0
        %315 = vmatprep.subr.mxu0 0.0
        %316 = vmatpush1.msra.mxu0 0.0
        %317 = vmatprep.subr.mxu0 0.0
        %318 = vmatpush1.msra.mxu0 0.0
        %319 = vmatprep.subr.mxu0 0.0
        %320 = vmatpush1.msra.mxu0 0.0
        %321 = vmatprep.subr.mxu0 0.0
        %322 = vmatpush1.msra.mxu0 0.0
        %323 = vmatprep.subr.mxu0 0.0
        %324 = vmatpush1.msra.mxu0 0.0
        %325 = vmatprep.subr.mxu0 0.0
        %326 = vmatpush1.msra.mxu0 0.0
        %327 = vmatprep.subr.mxu0 0.0
        %328 = vmatpush1.msra.mxu0 0.0
        %329 = vmatprep.subr.mxu0 0.0
        %330 = vmatpush1.msra.mxu0 0.0
        %331 = vmatprep.subr.mxu0 0.0
        %332 = vmatpush1.msra.mxu0 0.0
        %333 = vmatprep.subr.mxu0 0.0
        %334 = vmatpush1.msra.mxu0 0.0
        %335 = vmatprep.subr.mxu0 0.0
        %336 = vmatpush1.msra.mxu0 0.0
        %337 = vmatprep.subr.mxu0 0.0
        %338 = vmatpush1.msra.mxu0 0.0
        %339 = vmatprep.subr.mxu0 0.0
        %340 = vmatpush1.msra.mxu0 0.0
        %341 = vmatprep.subr.mxu0 0.0
        %342 = vmatpush1.msra.mxu0 0.0
        %343 = vmatprep.subr.mxu0 0.0
        %344 = vmatpush1.msra.mxu0 0.0
        %345 = vmatprep.subr.mxu0 0.0
        %346 = vmatpush1.msra.mxu0 0.0
        %347 = vmatprep.subr.mxu0 0.0
        %348 = vmatpush1.msra.mxu0 0.0
        %349 = vmatprep.subr.mxu0 0.0
        %350 = vmatpush1.msra.mxu0 0.0
        %351 = vmatprep.subr.mxu0 0.0
        %352 = vmatpush1.msra.mxu0 0.0
        %353 = vmatprep.subr.mxu0 0.0
        %354 = vmatpush1.msra.mxu0 0.0
        %355 = vmatprep.subr.mxu0 0.0
        %356 = vmatpush1.msra.mxu0 0.0
        %357 = vmatprep.subr.mxu0 0.0
        %358 = vmatpush1.msra.mxu0 0.0
        %359 = vmatprep.subr.mxu0 0.0
        %360 = vmatpush1.msra.mxu0 0.0
        %361 = vmatprep.subr.mxu0 0.0
        %362 = vmatpush1.msra.mxu0 0.0
        %363 = vmatprep.subr.mxu0 0.0
        %364 = vmatpush1.msra.mxu0 0.0
        %365 = vmatprep.mubr.f32.mxu0 0.0
        %366 = vmatmul.mubr.f32.gmra.mrb[0].mxu0 %v254
        %v367 = vpop.f32.mrb[0].mxu0
        %v368 = vadd.f32 %v250, %v367
        %v369 = vpop.f32.mrb[0].mxu0
        %370 = vmatprep.mubr.f32.mxu0 0.0
        %371 = vmatmul.mubr.f32.gmra.mrb[0].mxu0 %v257
        %v372 = vpop.f32.mrb[0].mxu0
        %v373 = vadd.f32 %v250, %v372
        %v374 = vpop.f32.mrb[0].mxu0
        %375 = vmatprep.mubr.f32.mxu0 0.0
        %376 = vmatmul.mubr.f32.gmra.mrb[0].mxu0 %v260
        %v377 = vpop.f32.mrb[0].mxu0
        %v378 = vadd.f32 %v250, %v377
        %v379 = vpop.f32.mrb[0].mxu0
        %380 = vmatprep.mubr.f32.mxu0 0.0
        %381 = vmatmul.mubr.f32.gmra.mrb[0].mxu0 %v263
        %v382 = vpop.f32.mrb[0].mxu0
        %v383 = vadd.f32 %v250, %v382
        %v384 = vpop.f32.mrb[0].mxu0
        %385 = vmatprep.mubr.f32.mxu0 0.0
        %386 = vmatmul.mubr.f32.gmra.mrb[0].mxu0 %v266
        %v387 = vpop.f32.mrb[0].mxu0
        %v388 = vadd.f32 %v250, %v387
        %v389 = vpop.f32.mrb[0].mxu0
        %390 = vmatprep.mubr.f32.mxu0 0.0
        %391 = vmatmul.mubr.f32.gmra.mrb[0].mxu0 %v269
        %v392 = vpop.f32.mrb[0].mxu0
        %v393 = vadd.f32 %v250, %v392
        %v394 = vpop.f32.mrb[0].mxu0
        %395 = vmatprep.mubr.f32.mxu0 0.0
        %396 = vmatmul.mubr.f32.gmra.mrb[0].mxu0 %v272
        %v397 = vpop.f32.mrb[0].mxu0
        %v398 = vadd.f32 %v250, %v397
        %v399 = vpop.f32.mrb[0].mxu0
        %400 = vmatprep.mubr.f32.mxu0 0.0
        %401 = vmatmul.mubr.f32.gmra.mrb[0].mxu0 %v275
        %v402 = vpop.f32.mrb[0].mxu0
        %v403 = vadd.f32 %v250, %v402
        %v404 = vpop.f32.mrb[0].mxu0
        %405 = vmatprep.mubr.f32.mxu0 0.0
        %406 = vmatmul.mubr.f32.gmra.mrb[0].mxu0 %v278
        %v407 = vpop.f32.mrb[0].mxu0
        %v408 = vadd.f32 %v250, %v407
        %v409 = vpop.f32.mrb[0].mxu0
        %410 = vmatprep.mubr.f32.mxu0 0.0
        %411 = vmatmul.mubr.f32.gmra.mrb[0].mxu0 %v281
        %v412 = vpop.f32.mrb[0].mxu0
        %v413 = vadd.f32 %v250, %v412
        %v414 = vpop.f32.mrb[0].mxu0
        %415 = vmatprep.mubr.f32.mxu0 0.0
        %416 = vmatmul.mubr.f32.gmra.mrb[0].mxu0 %v284
        %v417 = vpop.f32.mrb[0].mxu0
        %v418 = vadd.f32 %v250, %v417
        %v419 = vpop.f32.mrb[0].mxu0
        %420 = vmatprep.mubr.f32.mxu0 0.0
        %421 = vmatmul.mubr.f32.gmra.mrb[0].mxu0 %v287
        %v422 = vpop.f32.mrb[0].mxu0
        %v423 = vadd.f32 %v250, %v422
        %v424 = vpop.f32.mrb[0].mxu0
        %425 = vmatprep.mubr.f32.mxu0 0.0
        %426 = vmatmul.mubr.f32.gmra.mrb[0].mxu0 %v290
        %v427 = vpop.f32.mrb[0].mxu0
        %v428 = vadd.f32 %v250, %v427
        %v429 = vpop.f32.mrb[0].mxu0
        %430 = vmatprep.mubr.f32.mxu0 0.0
        %431 = vmatmul.mubr.f32.gmra.mrb[0].mxu0 %v293
        %v432 = vpop.f32.mrb[0].mxu0
        %v433 = vadd.f32 %v250, %v432
        %v434 = vpop.f32.mrb[0].mxu0
        %435 = vmatprep.mubr.f32.mxu0 0.0
        %436 = vmatmul.mubr.f32.gmra.mrb[0].mxu0 %v296
        %v437 = vpop.f32.mrb[0].mxu0
        %v438 = vadd.f32 %v250, %v437
        %v439 = vpop.f32.mrb[0].mxu0
        %440 = vmatprep.mubr.f32.mxu0 0.0
        %441 = vmatmul.mubr.f32.gmra.mrb[0].mxu0 %v299
        %v442 = vpop.f32.mrb[0].mxu0
        %v443 = vadd.f32 %v250, %v442
        %v444 = vpop.f32.mrb[0].mxu0
        %445 = vdwg.mxu0
        %v446 = vmax.f32 %v368, 0.0
        %v447 = vmax.f32 %v373, 0.0
        %v448 = vmax.f32 %v378, 0.0
        %v449 = vmax.f32 %v383, 0.0
        %v450 = vmax.f32 %v388, 0.0
        %v451 = vmax.f32 %v393, 0.0
        %v452 = vmax.f32 %v398, 0.0
        %v453 = vmax.f32 %v403, 0.0
        %v454 = vmax.f32 %v408, 0.0
        %v455 = vmax.f32 %v413, 0.0
        %v456 = vmax.f32 %v418, 0.0
        %v457 = vmax.f32 %v423, 0.0
        %v458 = vmax.f32 %v428, 0.0
        %v459 = vmax.f32 %v433, 0.0
        %v460 = vmax.f32 %v438, 0.0
        %v461 = vmax.f32 %v443, 0.0
        %v462 = vld [vmem:[%s3] sm:$0xf]
        %v463 = vld [vmem:[%s4] sm:$0xf]
        %465 = vset.pattern.permute.xlu0 0
        %466 = vperm.xlu0 %465, %v463
        %v467 = vpop.permute.xlu0 %466
        %v470 = vsel %vm252, %v462, 0
        %v473 = vsel %vm252, %v446, 0
        %v476 = vsel %vm252, %v447, 0
        %v479 = vsel %vm252, %v448, 0
        %v482 = vsel %vm252, %v449, 0
        %v485 = vsel %vm252, %v450, 0
        %v488 = vsel %vm252, %v451, 0
        %v491 = vsel %vm252, %v452, 0
        %v494 = vsel %vm252, %v453, 0
        %v497 = vsel %vm252, %v454, 0
        %v500 = vsel %vm252, %v455, 0
        %v503 = vsel %vm252, %v456, 0
        %v506 = vsel %vm252, %v457, 0
        %v509 = vsel %vm252, %v458, 0
        %v512 = vsel %vm252, %v459, 0
        %v515 = vsel %vm252, %v460, 0
        %v518 = vsel %vm252, %v461, 0
        %520 = vmatprep.subr.mxu0 0.0
        %521 = vmatpush1.xpose.msra.mxu0 %v473
        %522 = vmatprep.subr.mxu0 0.0
        %523 = vmatpush1.xpose.msra.mxu0 %v476
        %524 = vmatprep.subr.mxu0 0.0
        %525 = vmatpush1.xpose.msra.mxu0 %v479
        %526 = vmatprep.subr.mxu0 0.0
        %527 = vmatpush1.xpose.msra.mxu0 %v482
        %528 = vmatprep.subr.mxu0 0.0
        %529 = vmatpush1.xpose.msra.mxu0 %v485
        %530 = vmatprep.subr.mxu0 0.0
        %531 = vmatpush1.xpose.msra.mxu0 %v488
        %532 = vmatprep.subr.mxu0 0.0
        %533 = vmatpush1.xpose.msra.mxu0 %v491
        %534 = vmatprep.subr.mxu0 0.0
        %535 = vmatpush1.xpose.msra.mxu0 %v494
        %536 = vmatprep.subr.mxu0 0.0
        %537 = vmatpush1.xpose.msra.mxu0 %v497
        %538 = vmatprep.subr.mxu0 0.0
        %539 = vmatpush1.xpose.msra.mxu0 %v500
        %540 = vmatprep.subr.mxu0 0.0
        %541 = vmatpush1.xpose.msra.mxu0 %v503
        %542 = vmatprep.subr.mxu0 0.0
        %543 = vmatpush1.xpose.msra.mxu0 %v506
        %544 = vmatprep.subr.mxu0 0.0
        %545 = vmatpush1.xpose.msra.mxu0 %v509
        %546 = vmatprep.subr.mxu0 0.0
        %547 = vmatpush1.xpose.msra.mxu0 %v512
        %548 = vmatprep.subr.mxu0 0.0
        %549 = vmatpush1.xpose.msra.mxu0 %v515
        %550 = vmatprep.subr.mxu0 0.0
        %551 = vmatpush1.xpose.msra.mxu0 %v518
        %552 = vmatprep.subr.mxu0 0.0
        %553 = vmatpush1.xpose.msra.mxu0 0.0
        %554 = vmatprep.subr.mxu0 0.0
        %555 = vmatpush1.xpose.msra.mxu0 0.0
        %556 = vmatprep.subr.mxu0 0.0
        %557 = vmatpush1.xpose.msra.mxu0 0.0
        %558 = vmatprep.subr.mxu0 0.0
        %559 = vmatpush1.xpose.msra.mxu0 0.0
        %560 = vmatprep.subr.mxu0 0.0
        %561 = vmatpush1.xpose.msra.mxu0 0.0
        %562 = vmatprep.subr.mxu0 0.0
        %563 = vmatpush1.xpose.msra.mxu0 0.0
        %564 = vmatprep.subr.mxu0 0.0
        %565 = vmatpush1.xpose.msra.mxu0 0.0
        %566 = vmatprep.subr.mxu0 0.0
        %567 = vmatpush1.xpose.msra.mxu0 0.0
        %568 = vmatprep.subr.mxu0 0.0
        %569 = vmatpush1.xpose.msra.mxu0 0.0
        %570 = vmatprep.subr.mxu0 0.0
        %571 = vmatpush1.xpose.msra.mxu0 0.0
        %572 = vmatprep.subr.mxu0 0.0
        %573 = vmatpush1.xpose.msra.mxu0 0.0
        %574 = vmatprep.subr.mxu0 0.0
        %575 = vmatpush1.xpose.msra.mxu0 0.0
        %576 = vmatprep.subr.mxu0 0.0
        %577 = vmatpush1.xpose.msra.mxu0 0.0
        %578 = vmatprep.subr.mxu0 0.0
        %579 = vmatpush1.xpose.msra.mxu0 0.0
        %580 = vmatprep.subr.mxu0 0.0
        %581 = vmatpush1.xpose.msra.mxu0 0.0
        %582 = vmatprep.subr.mxu0 0.0
        %583 = vmatpush1.xpose.msra.mxu0 0.0
        %584 = vmatprep.mubr.f32.mxu0 0.0
        %585 = vmatmul.mubr.f32.gmra.mrb[0].mxu0 %v470
        %v586 = vpop.f32.mrb[0].mxu0
        %v587 = vadd.f32 %v467, %v586
        %v588 = vpop.f32.mrb[0].mxu0
        %589 = vdwg.mxu0
        %vm590 = vcmask 1043456
        %v591 = vsel %vm590, %v587, -inf
        %v592 = vrot.slane %v591, 4
        %v593 = vmax.f32 %v591, %v592
        %v594 = vrot.slane %v593, 2
        %v595 = vmax.f32 %v593, %v594
        %v596 = vrot.slane %v595, 1
        %v597 = vmax.f32 %v595, %v596
        %v598 = vsub.f32 %v587, %v597
        %v599 = vmul.f32 %v598, 1.442695
        %v600 = vpow.pop %v599
        %v601 = vsel %vm590, %v600, 0.0
        %v602 = vrot.slane %v601, 4
        %v603 = vadd.f32 %v601, %v602
        %v604 = vrot.slane %v603, 2
        %v605 = vadd.f32 %v603, %v604
        %v606 = vrot.slane %v605, 1
        %v607 = vadd.f32 %v605, %v606
        %v608 = vrcp.pop %v607
        %v609 = vmul.f32 %v600, %v608
        %610 = vst [vmem:[%s218] sm:$0xf] %v609
        %s611 = sand.u32 %s137, 1
        %s612 = scalar_lea.sflag [#allocation3], %s611
        %s613 = sand.u32 %s137, 1
        %s614 = smul.addr %s613, 4
        %s615 = scalar_lea.vmem [#allocation2], %s614
        // Predicated region
        $region41: #{tpu_custom_call.1} parent=39 // pred_check
          %p616 = pneg %p147
        $region42: #{tpu_custom_call.1} parent=39 // pred_check_branch
          %618 = sbr.rel (%p616) target = $region44
        $region43: #{tpu_custom_call.1} parent=39 // pred_region
          %s620 = ssub.s32 64, 64
          %621 = vsyncadd %s612, %s620
          %s622 = smul.addr %s19, 64
          %s623 = scalar_lea.hbm %s5, %s622
          %s625 = sshll.u32 %s615, 4
          %s626 = int_to_ptr.vmem [resolvable:$true] %s625
          %628 = dma.vmem_to_hbm [thread:$0]  %s626, 64, %s623, %s612
        $region44: #{tpu_custom_call.1} parent=39 // pred_fallthru
          _
      $region40: #{tpu_custom_call.1} parent=5 // pred_fallthru
        _
      %p629 = scmp.le.s32.totalorder 2, %s14
      // Predicated region
      $region45: #{tpu_custom_call.1} parent=5 // pred_check
        %p630 = pneg %p629
      $region46: #{tpu_custom_call.1} parent=5 // pred_check_branch
        %632 = sbr.rel (%p630) target = $region48
      $region47: #{tpu_custom_call.1} parent=5 // pred_region
        %s633 = ssub.s32 %s14, 2
        // Predicated region
        $region49: #{tpu_custom_call.1} parent=47 // pred_check
          %p634 = pneg %p153
        $region50: #{tpu_custom_call.1} parent=47 // pred_check_branch
          %636 = sbr.rel (%p634) target = $region52
        $region51: #{tpu_custom_call.1} parent=47 // pred_region
          %s637 = sand.u32 %s138, 1
          %s638 = scalar_lea.sflag [#allocation3], %s637
          %s639 = sand.u32 %s138, 1
          %s640 = smul.addr %s639, 4
          %s641 = scalar_lea.vmem [#allocation2], %s640
          %642 = dma.done %s638, 64
        $region52: #{tpu_custom_call.1} parent=47 // pred_fallthru
          _
      $region48: #{tpu_custom_call.1} parent=5 // pred_fallthru
        _
    $region6: #{tpu_custom_call.1} parent=1 // loop_footer
      %s18 = sadd.s32 1, %s14
    $region7: #{tpu_custom_call.1} parent=1 // loop_footer_branch
      %13 = sbr.rel target = $region3
    $region8: #{tpu_custom_call.1} parent=1 // loop_exit
      _
    %643 = vsyncpa [#allocation3], 1
    %s644 = scalar_lea.sflag [#allocation3], 1
    %645 = vsyncpa %s644, 1

</llo_original>
